<compile_context>
chip_gen: v7x
topology: tpu7x:2x2x1
jax: 0.10.0
libtpu: 0.0.40
codegen_flags: <defaults>
</compile_context>

<pallas_src>
import math
import jax
import jax.numpy as jnp
from jax.experimental import pallas as pl
from jax.experimental.pallas import tpu as pltpu

K = 7
PAD = 3
C_IN = 3
C_OUT = 64
KKC = K * K * C_IN  # 147
EPS = 1e-5


def flatconv_kernel(p_ref, w_ref, o_ref):
    # p_ref: (1, KKC, HW)    im2col patches for one sample (lane dim = HW)
    # w_ref: (C_OUT, KKC)    conv weight, columns ordered (kh, kw, cin)
    # o_ref: (1, C_OUT, HW)  output, NCHW-flat (lane dim = HW)
    patches = p_ref[0]          # (KKC, HW)
    w = w_ref[...]              # (C_OUT, KKC)

    # Single lane-dense MXU matmul: (C_OUT, KKC) @ (KKC, HW) -> (C_OUT, HW).
    acc = jnp.dot(w, patches, preferred_element_type=jnp.float32)

    # InstanceNorm2d(64): per-channel over spatial dim, biased var, no affine.
    mean = jnp.mean(acc, axis=1, keepdims=True)
    centered = acc - mean
    var = jnp.mean(centered * centered, axis=1, keepdims=True)
    y = centered * jax.lax.rsqrt(var + EPS)

    # ReLU
    o_ref[0] = jnp.maximum(y, 0.0)


def flat_convolution(x_nchw, weight_oihw, bias=None):
    """x_nchw: (N, 3, H, W) f32; weight_oihw: (64, 3, 7, 7) f32; bias: (64,) f32.

    `bias` is accepted for API parity but not used: InstanceNorm2d(affine=False)
    cancels a per-channel constant bias exactly, so it is dead work.
    """
    del bias
    N, C, H, W = x_nchw.shape
    assert C == C_IN
    HW = H * W

    # --- wrapper glue (XLA): pad + im2col into a lane-dense (N, 147, H*W) slab ---
    xp = jnp.pad(x_nchw, ((0, 0), (0, 0), (PAD, PAD), (PAD, PAD)))  # (N, C, H+6, W+6)
    cols = [
        xp[:, :, kh:kh + H, kw:kw + W].reshape(N, C_IN, HW)
        for kh in range(K) for kw in range(K)
    ]
    patches = jnp.concatenate(cols, axis=1)  # (N, KKC, HW), index = (kh*K+kw)*C_IN + cin

    # (C_OUT, C_IN, K, K) -> (C_OUT, K, K, C_IN) -> (C_OUT, KKC); matches patch order.
    w_t = jnp.transpose(weight_oihw, (0, 2, 3, 1)).reshape(C_OUT, KKC)

    out_flat = pl.pallas_call(
        flatconv_kernel,
        out_shape=jax.ShapeDtypeStruct((N, C_OUT, HW), jnp.float32),
        grid_spec=pltpu.PrefetchScalarGridSpec(
            num_scalar_prefetch=0,
            grid=(N,),
            in_specs=[
                pl.BlockSpec((1, KKC, HW), lambda n: (n, 0, 0)),
                pl.BlockSpec((C_OUT, KKC), lambda n: (0, 0)),
            ],
            out_specs=pl.BlockSpec((1, C_OUT, HW), lambda n: (n, 0, 0)),
        ),
        compiler_params=pltpu.CompilerParams(
            dimension_semantics=("parallel",),
            vmem_limit_bytes=64 << 20,
        ),
    )(patches, w_t)

    return out_flat.reshape(N, C_OUT, H, W)  # free reshape, already NCHW


def ref_forward(x_nchw, weight_oihw, bias):
    """Pure-JAX reference mirroring the PyTorch module (with bias)."""
    y = jax.lax.conv_general_dilated(
        x_nchw, weight_oihw, window_strides=(1, 1),
        padding=((PAD, PAD), (PAD, PAD)),
        dimension_numbers=("NCHW", "OIHW", "NCHW"),
        precision=jax.lax.Precision.HIGHEST,
    )
    y = y + bias[None, :, None, None]
    mean = y.mean(axis=(2, 3), keepdims=True)
    var = ((y - mean) ** 2).mean(axis=(2, 3), keepdims=True)
    y = (y - mean) / jnp.sqrt(var + EPS)
    return jnp.maximum(y, 0.0)


if __name__ == "__main__":
    key = jax.random.PRNGKey(0)
    k_x, k_w, k_b = jax.random.split(key, 3)

    # Deterministic synthetic parameters matching the module's init scheme:
    # Conv2d weight ~ N(0, sqrt(2 / (k*k*out_channels))), bias ~ U(-1/sqrt(fan_in), ...)
    n = K * K * C_OUT
    weight = jax.random.normal(k_w, (C_OUT, C_IN, K, K), jnp.float32) * math.sqrt(2.0 / n)
    bound = 1.0 / math.sqrt(C_IN * K * K)
    bias = jax.random.uniform(k_b, (C_OUT,), jnp.float32, -bound, bound)

    x = jax.random.normal(k_x, (2, C_IN, 16, 16), jnp.float32)

    out = flat_convolution(x, weight, bias)
    out = jax.block_until_ready(out)
    assert out.shape == (2, C_OUT, 16, 16), out.shape

    ref = jax.block_until_ready(ref_forward(x, weight, bias))
    assert jnp.allclose(out, ref, rtol=5e-3, atol=5e-3), float(jnp.max(jnp.abs(out - ref)))

    print("KERNEL_OK")
</pallas_src>

<mosaic_0001>
module attributes {stable_mosaic.version = 11 : i64} {
  func.func @flatconv_kernel(%arg0: i32, %arg1: memref<1x147x256xf32, #tpu.memory_space<vmem>>, %arg2: memref<64x147xf32, #tpu.memory_space<vmem>>, %arg3: memref<1x64x256xf32, #tpu.memory_space<vmem>>) attributes {dimension_semantics = [#tpu.dimension_semantics<parallel>], iteration_bounds = array<i64: 2>, scalar_prefetch = 0 : i64, scratch_operands = 0 : i64, tpu.core_type = #tpu.core_type<tc>, window_params = [{transform_indices = @transform_0, window_bounds = array<i64: 1, 147, 256>}, {pipeline_mode = #tpu.pipeline_mode<synchronous>, transform_indices = @transform_1, window_bounds = array<i64: 64, 147>}, {transform_indices = @transform_2, window_bounds = array<i64: 1, 64, 256>}]} {
    %c0 = arith.constant 0 : index
    %c0_0 = arith.constant 0 : index
    %c0_1 = arith.constant 0 : index
    %0 = vector.load %arg1[%c0, %c0_0, %c0_1] : memref<1x147x256xf32, #tpu.memory_space<vmem>>, vector<1x147x256xf32>
    %1 = vector.shape_cast %0 : vector<1x147x256xf32> to vector<147x256xf32>
    %c0_2 = arith.constant 0 : index
    %c0_3 = arith.constant 0 : index
    %2 = vector.load %arg2[%c0_2, %c0_3] : memref<64x147xf32, #tpu.memory_space<vmem>>, vector<64x147xf32>
    %cst = arith.constant dense<0.000000e+00> : vector<64x256xf32>
    %3 = tpu.matmul %2, %1, %cst {dimension_numbers = #tpu.dot_dimension_numbers<[1], [0], [0], [1], [0, 0, 1, 1], [], []>} : vector<64x147xf32>, vector<147x256xf32>, vector<64x256xf32> -> vector<64x256xf32>
    %cst_4 = arith.constant dense<0.000000e+00> : vector<64xf32>
    %4 = vector.multi_reduction <add>, %3, %cst_4 [1] : vector<64x256xf32> to vector<64xf32>
    %5 = vector.shape_cast %4 : vector<64xf32> to vector<64x1xf32>
    %cst_5 = arith.constant 2.560000e+02 : f32
    %6 = vector.broadcast %cst_5 : f32 to vector<64x1xf32>
    %7 = arith.divf %5, %6 : vector<64x1xf32>
    %8 = vector.broadcast %7 : vector<64x1xf32> to vector<64x256xf32>
    %9 = arith.subf %3, %8 : vector<64x256xf32>
    %10 = arith.mulf %9, %9 : vector<64x256xf32>
    %cst_6 = arith.constant dense<0.000000e+00> : vector<64xf32>
    %11 = vector.multi_reduction <add>, %10, %cst_6 [1] : vector<64x256xf32> to vector<64xf32>
    %12 = vector.shape_cast %11 : vector<64xf32> to vector<64x1xf32>
    %cst_7 = arith.constant 2.560000e+02 : f32
    %13 = vector.broadcast %cst_7 : f32 to vector<64x1xf32>
    %14 = arith.divf %12, %13 : vector<64x1xf32>
    %cst_8 = arith.constant 9.99999974E-6 : f32
    %15 = vector.broadcast %cst_8 : f32 to vector<64x1xf32>
    %16 = arith.addf %14, %15 : vector<64x1xf32>
    %17 = math.rsqrt %16 : vector<64x1xf32>
    %18 = vector.broadcast %17 : vector<64x1xf32> to vector<64x256xf32>
    %19 = arith.mulf %9, %18 : vector<64x256xf32>
    %cst_9 = arith.constant 0.000000e+00 : f32
    %20 = vector.broadcast %cst_9 : f32 to vector<64x256xf32>
    %21 = arith.maximumf %19, %20 : vector<64x256xf32>
    %c0_10 = arith.constant 0 : index
    %c0_11 = arith.constant 0 : index
    %c0_12 = arith.constant 0 : index
    %22 = vector.load %arg3[%c0_10, %c0_11, %c0_12] : memref<1x64x256xf32, #tpu.memory_space<vmem>>, vector<1x64x256xf32>
    %23 = vector.shape_cast %22 : vector<1x64x256xf32> to vector<64x256xf32>
    %24 = vector.shape_cast %21 : vector<64x256xf32> to vector<1x64x256xf32>
    tpu.vector_store %arg3[%c0_10, %c0_11, %c0_12], %24 {strides = array<i32>} : memref<1x64x256xf32, #tpu.memory_space<vmem>>, vector<1x64x256xf32>,
    return
  }
  func.func @transform_0(%arg0: i32) -> (i32, i32, i32) {
    %c0_i32 = arith.constant 0 : i32
    %c0_i32_0 = arith.constant 0 : i32
    %c0_i32_1 = arith.constant 0 : i32
    return %arg0, %c0_i32, %c0_i32_0 : i32, i32, i32
  }
  func.func @transform_1(%arg0: i32) -> (i32, i32) {
    %c0_i32 = arith.constant 0 : i32
    %c0_i32_0 = arith.constant 0 : i32
    %c0_i32_1 = arith.constant 0 : i32
    return %c0_i32, %c0_i32_0 : i32, i32
  }
  func.func @transform_2(%arg0: i32) -> (i32, i32, i32) {
    %c0_i32 = arith.constant 0 : i32
    %c0_i32_0 = arith.constant 0 : i32
    %c0_i32_1 = arith.constant 0 : i32
    return %arg0, %c0_i32, %c0_i32_0 : i32, i32, i32
  }
}

</mosaic_0001>

<llo_original>
// kernel: tpu_custom_call.1
$region0: #{tpu_custom_call.1}
  #allocation0 [shape = 'u32[]', space=smem, size = 0x4, offset = 0x4, fixed_abs, tag = 'smem constant byte address 0x4 - core index']
  #allocation1 [shape = 'u32[144,128]{1,0:T(1,128)}', space=vmem, size = 0x12000, scoped, tag = 'internal scratch']
  %s0 = inlined_call_operand.hbm [shape: f32[2,147,256], index: 0, kind: input, shape index: {}]
  %s1 = inlined_call_operand.hbm [shape: f32[64,147], index: 1, kind: input, shape index: {}]
  %s2 = inlined_call_operand.hbm [shape: f32[2,64,256], index: 2, kind: output, shape index: {}]
  %s3 = sld [smem:[#allocation0]]
  $region49: #{tpu_custom_call.1} parent=0
    _
  %s5 = ssub.s32 1, %s3
  %s6 = scalar_select 0, %s5, %s3
  $region1: #{tpu_custom_call.1} parent=0
    #allocation2 [shape = 'u8[311296]{0}', space=vmem, size = 0x4c000, scoped, tag = 'input window, operand 0']
    #allocation3 [shape = 's32[2]{0}', space=sflag, size = 0x8, scoped, tag = 'scoped memory for tpu_custom_call.1']
    #allocation4 [shape = 's32[2]{0}', space=sflag, size = 0x8, scoped, tag = 'scoped memory for tpu_custom_call.1']
    #allocation5 [shape = 'u8[65536]{0}', space=vmem, size = 0x10000, scoped, tag = 'input window, operand 1, single buffered']
    #allocation6 [shape = 's32[1]{0}', space=sflag, size = 0x4, scoped, tag = 'scoped memory for tpu_custom_call.1']
    #allocation7 [shape = 'u8[131072]{0}', space=vmem, size = 0x20000, scoped, tag = 'output window, operand 0']
    %7 = vsyncpa [#allocation3], 0
    %s8 = scalar_lea.sflag [#allocation3], 1
    %9 = vsyncpa %s8, 0
    %10 = vsyncpa [#allocation6], 0
    %11 = vsyncpa [#allocation4], 0
    %s12 = scalar_lea.sflag [#allocation4], 1
    %13 = vsyncpa %s12, 0
    loop: start=0, step=1, limit=4
    $region2: #{tpu_custom_call.1} parent=1 // loop_pre_header
      _
    $region3: #{tpu_custom_call.1} parent=1 // loop_header
      %s15 = sphi 0, %s19
      %p16 = scmp.ge.s32.totalorder %s15, 4
      %s25 = sphi 0, %s27
      %s28 = sphi 0, %s25
      %s29 = sphi 0, %s28
      %s45 = sphi 0, %s29
      %s49 = sphi 0, %s49
      %s51 = sphi 0, %s49
      %s52 = sphi 0, %s51
      %s66 = sphi 0, %s52
      %s72 = sphi 0, %s74
      %s75 = sphi 0, %s72
      %s76 = sphi 0, %s75
      %s92 = sphi 0, %s76
    $region4: #{tpu_custom_call.1} parent=1 // loop_header_branch
      %18 = sbr.rel (%p16) target = $region8
    $region5: #{tpu_custom_call.1} parent=1 // loop_body
      %s20 = ssub.s32 %s15, 1
      %s21 = ssub.s32 %s15, 2
      %s22 = sadd.s32 %s15, 1
      %s23 = ssub.s32 %s15, %s22
      %p24 = scmp.eq.s32.totalorder %s23, 0
      %s26 = sadd.s32 %s25, 1
      %s27 = scalar_select %p24, %s25, %s26
      %p30 = pneg %p24
      %p31 = scmp.eq.s32.totalorder %s15, 1
      %p32 = por %p30, %p31
      %p33 = scmp.ne.s32.totalorder %s25, %s28
      %p34 = scmp.eq.s32.totalorder %s15, 0
      %p35 = por %p33, %p34
      %p36 = scmp.ne.s32.totalorder %s25, %s28
      %p37 = scmp.eq.s32.totalorder %s20, 1
      %p38 = por %p36, %p37
      %p39 = scmp.ne.s32.totalorder %s28, %s29
      %p40 = scmp.eq.s32.totalorder %s20, 0
      %p41 = por %p39, %p40
      %p42 = scmp.ne.s32.totalorder %s28, %s29
      %p43 = scmp.eq.s32.totalorder %s21, 1
      %p44 = por %p42, %p43
      %p46 = scmp.ne.s32.totalorder %s29, %s45
      %p47 = scmp.eq.s32.totalorder %s21, 0
      %p48 = por %p46, %p47
      %s50 = sadd.s32 %s49, 1
      %p53 = scmp.eq.s32.totalorder %s15, 1
      %p54 = scmp.ne.s32.totalorder %s49, %s51
      %p55 = scmp.eq.s32.totalorder %s15, 0
      %p56 = por %p54, %p55
      %p57 = scmp.ne.s32.totalorder %s49, %s51
      %p58 = scmp.eq.s32.totalorder %s20, 1
      %p59 = por %p57, %p58
      %p60 = scmp.ne.s32.totalorder %s51, %s52
      %p61 = scmp.eq.s32.totalorder %s20, 0
      %p62 = por %p60, %p61
      %p63 = scmp.ne.s32.totalorder %s51, %s52
      %p64 = scmp.eq.s32.totalorder %s21, 1
      %p65 = por %p63, %p64
      %p67 = scmp.ne.s32.totalorder %s52, %s66
      %p68 = scmp.eq.s32.totalorder %s21, 0
      %p69 = por %p67, %p68
      %s70 = ssub.s32 %s15, %s22
      %p71 = scmp.eq.s32.totalorder %s70, 0
      %s73 = sadd.s32 %s72, 1
      %s74 = scalar_select %p71, %s72, %s73
      %p77 = pneg %p71
      %p78 = scmp.eq.s32.totalorder %s15, 1
      %p79 = por %p77, %p78
      %p80 = scmp.ne.s32.totalorder %s72, %s75
      %p81 = scmp.eq.s32.totalorder %s15, 0
      %p82 = por %p80, %p81
      %p83 = scmp.ne.s32.totalorder %s72, %s75
      %p84 = scmp.eq.s32.totalorder %s20, 1
      %p85 = por %p83, %p84
      %p86 = scmp.ne.s32.totalorder %s75, %s76
      %p87 = scmp.eq.s32.totalorder %s20, 0
      %p88 = por %p86, %p87
      %p89 = scmp.ne.s32.totalorder %s75, %s76
      %p90 = scmp.eq.s32.totalorder %s21, 1
      %p91 = por %p89, %p90
      %p93 = scmp.ne.s32.totalorder %s76, %s92
      %p94 = scmp.eq.s32.totalorder %s21, 0
      %p95 = por %p93, %p94
      %p96 = scmp.le.s32.totalorder 1, %s15
      %p97 = scmp.lt.s32.totalorder %s15, 3
      %p98 = pnand %p96, %p97
      %p99 = pneg %p98
      // Predicated region
      $region9: #{tpu_custom_call.1} parent=5 // pred_check
        _
      $region10: #{tpu_custom_call.1} parent=5 // pred_check_branch
        %101 = sbr.rel (%p98) target = $region12
      $region11: #{tpu_custom_call.1} parent=5 // pred_region
        %s102 = ssub.s32 %s15, 1
        // Predicated region
        $region13: #{tpu_custom_call.1} parent=11 // pred_check
          %p103 = pneg %p62
        $region14: #{tpu_custom_call.1} parent=11 // pred_check_branch
          %105 = sbr.rel (%p103) target = $region16
        $region15: #{tpu_custom_call.1} parent=11 // pred_region
          %s107 = ssub.s32 2048, 2048
          %108 = vsyncadd [#allocation6], %s107
          %s109 = sshll.u32 [#allocation5], 4
          %s110 = int_to_ptr.vmem [resolvable:$true] %s109
          %115 = dma.hbm_to_vmem [thread:$0]  %s1, 2048, %s110, [#allocation6], 256, 256, 16
        $region16: #{tpu_custom_call.1} parent=11 // pred_fallthru
          _
      $region12: #{tpu_custom_call.1} parent=5 // pred_fallthru
        _
      %p116 = scmp.lt.s32.totalorder %s15, 2
      // Predicated region
      $region17: #{tpu_custom_call.1} parent=5 // pred_check
        %p117 = pneg %p116
      $region18: #{tpu_custom_call.1} parent=5 // pred_check_branch
        %119 = sbr.rel (%p117) target = $region20
      $region19: #{tpu_custom_call.1} parent=5 // pred_region
        // Predicated region
        $region21: #{tpu_custom_call.1} parent=19 // pred_check
          %p120 = pneg %p35
        $region22: #{tpu_custom_call.1} parent=19 // pred_check_branch
          %122 = sbr.rel (%p120) target = $region24
        $region23: #{tpu_custom_call.1} parent=19 // pred_region
          %s123 = sand.u32 %s25, 1
          %s124 = scalar_lea.sflag [#allocation3], %s123
          %s125 = sand.u32 %s25, 1
          %s126 = smul.addr %s125, 304
          %s127 = scalar_lea.vmem [#allocation2], %s126
          %s129 = ssub.s32 4864, 4864
          %130 = vsyncadd %s124, %s129
          %s131 = smul.addr %s15, 38
          %s132 = smul.addr %s131, 128
          %s133 = scalar_lea.hbm %s0, %s132
          %s134 = sshll.u32 %s127, 4
          %s135 = int_to_ptr.vmem [resolvable:$true] %s134
          %140 = dma.hbm_to_vmem [thread:$0]  %s133, 4864, %s135, %s124, 256, 256, 16
        $region24: #{tpu_custom_call.1} parent=19 // pred_fallthru
          _
      $region20: #{tpu_custom_call.1} parent=5 // pred_fallthru
        _
      %p141 = scmp.le.s32.totalorder 1, %s15
      %p142 = scmp.lt.s32.totalorder %s15, 3
      %p143 = pnand %p141, %p142
      %p144 = pneg %p143
      // Predicated region
      $region25: #{tpu_custom_call.1} parent=5 // pred_check
        _
      $region26: #{tpu_custom_call.1} parent=5 // pred_check_branch
        %146 = sbr.rel (%p143) target = $region28
      $region27: #{tpu_custom_call.1} parent=5 // pred_region
        %s147 = ssub.s32 %s15, 1
        %s148 = sand.u32 %s28, 1
        %s149 = scalar_lea.sflag [#allocation3], %s148
        %s150 = sand.u32 %s28, 1
        %s151 = smul.addr %s150, 304
        %s152 = scalar_lea.vmem [#allocation2], %s151
        // Predicated region
        $region29: #{tpu_custom_call.1} parent=27 // pred_check
          %p153 = pneg %p41
        $region30: #{tpu_custom_call.1} parent=27 // pred_check_branch
          %155 = sbr.rel (%p153) target = $region32
        $region31: #{tpu_custom_call.1} parent=27 // pred_region
          %156 = dma.done %s149, 4864
        $region32: #{tpu_custom_call.1} parent=27 // pred_fallthru
          _
        // Predicated region
        $region33: #{tpu_custom_call.1} parent=27 // pred_check
          %p157 = pneg %p62
        $region34: #{tpu_custom_call.1} parent=27 // pred_check_branch
          %159 = sbr.rel (%p157) target = $region36
        $region35: #{tpu_custom_call.1} parent=27 // pred_region
          %160 = dma.done [#allocation6], 2048
        $region36: #{tpu_custom_call.1} parent=27 // pred_fallthru
          _
        %s161 = sand.u32 %s28, 1
        %s162 = scalar_lea.sflag [#allocation3], %s161
        %s163 = sand.u32 %s28, 1
        %s164 = smul.addr %s163, 304
        %s165 = scalar_lea.vmem [#allocation2], %s164
        %p166 = pneg %p41
        %p167 = pneg %p38
        %p168 = pneg %p62
        %p169 = pneg %p59
        %p170 = pneg %p88
        %p171 = pneg %p85
        %s172 = sand.u32 %s75, 1
        %s173 = scalar_lea.sflag [#allocation4], %s172
        %s174 = sand.u32 %s75, 1
        %s175 = smul.addr %s174, 128
        %s176 = scalar_lea.vmem [#allocation7], %s175
        %v177 = vld [vmem:[%s152] sm:$0xff]
        %v178 = vld [vmem:[%s152 + $0x8] sm:$0xff]
        %v179 = vld [vmem:[%s152 + $0x10] sm:$0xff]
        %v180 = vld [vmem:[%s152 + $0x18] sm:$0xff]
        %v181 = vld [vmem:[%s152 + $0x20] sm:$0xff]
        %v182 = vld [vmem:[%s152 + $0x28] sm:$0xff]
        %v183 = vld [vmem:[%s152 + $0x30] sm:$0xff]
        %v184 = vld [vmem:[%s152 + $0x38] sm:$0xff]
        %v185 = vld [vmem:[%s152 + $0x40] sm:$0xff]
        %v186 = vld [vmem:[%s152 + $0x48] sm:$0xff]
        %v187 = vld [vmem:[%s152 + $0x50] sm:$0xff]
        %v188 = vld [vmem:[%s152 + $0x58] sm:$0xff]
        %v189 = vld [vmem:[%s152 + $0x60] sm:$0xff]
        %v190 = vld [vmem:[%s152 + $0x68] sm:$0xff]
        %v191 = vld [vmem:[%s152 + $0x70] sm:$0xff]
        %v192 = vld [vmem:[%s152 + $0x78] sm:$0xff]
        %v193 = vld [vmem:[%s152 + $0x80] sm:$0xff]
        %v194 = vld [vmem:[%s152 + $0x88] sm:$0xff]
        %v195 = vld [vmem:[%s152 + $0x90] sm:$0xff]
        %v196 = vld [vmem:[%s152 + $0x98] sm:$0xff]
        %v197 = vld [vmem:[%s152 + $0xa0] sm:$0xff]
        %v198 = vld [vmem:[%s152 + $0xa8] sm:$0xff]
        %v199 = vld [vmem:[%s152 + $0xb0] sm:$0xff]
        %v200 = vld [vmem:[%s152 + $0xb8] sm:$0xff]
        %v201 = vld [vmem:[%s152 + $0xc0] sm:$0xff]
        %v202 = vld [vmem:[%s152 + $0xc8] sm:$0xff]
        %v203 = vld [vmem:[%s152 + $0xd0] sm:$0xff]
        %v204 = vld [vmem:[%s152 + $0xd8] sm:$0xff]
        %v205 = vld [vmem:[%s152 + $0xe0] sm:$0xff]
        %v206 = vld [vmem:[%s152 + $0xe8] sm:$0xff]
        %v207 = vld [vmem:[%s152 + $0xf0] sm:$0xff]
        %v208 = vld [vmem:[%s152 + $0xf8] sm:$0xff]
        %v209 = vld [vmem:[%s152 + $0x100] sm:$0xff]
        %v210 = vld [vmem:[%s152 + $0x108] sm:$0xff]
        %v211 = vld [vmem:[%s152 + $0x110] sm:$0xff]
        %v212 = vld [vmem:[%s152 + $0x118] sm:$0xff]
        %v213 = vld [vmem:[%s152 + $0x120] sm:$0x7]
        %v214 = vld [vmem:[%s152 + $0x128] sm:$0x7]
        %v215 = vld [vmem:[#allocation5] sm:$0xff]
        %v216 = vld [vmem:[#allocation5 + $0x8] sm:$0xff]
        %v217 = vld [vmem:[#allocation5 + $0x10] sm:$0xff]
        %v218 = vld [vmem:[#allocation5 + $0x18] sm:$0xff]
        %v219 = vld [vmem:[#allocation5 + $0x20] sm:$0xff]
        %v220 = vld [vmem:[#allocation5 + $0x28] sm:$0xff]
        %v221 = vld [vmem:[#allocation5 + $0x30] sm:$0xff]
        %v222 = vld [vmem:[#allocation5 + $0x38] sm:$0xff]
        %v223 = vld [vmem:[#allocation5 + $0x40] sm:$0xff]
        %v224 = vld [vmem:[#allocation5 + $0x48] sm:$0xff]
        %v225 = vld [vmem:[#allocation5 + $0x50] sm:$0xff]
        %v226 = vld [vmem:[#allocation5 + $0x58] sm:$0xff]
        %v227 = vld [vmem:[#allocation5 + $0x60] sm:$0xff]
        %v228 = vld [vmem:[#allocation5 + $0x68] sm:$0xff]
        %v229 = vld [vmem:[#allocation5 + $0x70] sm:$0xff]
        %v230 = vld [vmem:[#allocation5 + $0x78] sm:$0xff]
        %vm231 = vcmask 154624
        %v233 = vsel %vm231, %v216, 0
        %v236 = vsel %vm231, %v218, 0
        %v239 = vsel %vm231, %v220, 0
        %v242 = vsel %vm231, %v222, 0
        %v245 = vsel %vm231, %v224, 0
        %v248 = vsel %vm231, %v226, 0
        %v251 = vsel %vm231, %v228, 0
        %v254 = vsel %vm231, %v230, 0
        %vm256 = vcmask 1042432
        %v258 = vsel %vm256, %v213, 0
        %v261 = vsel %vm256, %v214, 0
        %263 = vmatprep.subr.mxu0 %v178
        %264 = vmatpush1.msra.mxu0 %v177
        %265 = vmatprep.subr.mxu0 %v180
        %266 = vmatpush1.msra.mxu0 %v179
        %267 = vmatprep.subr.mxu0 %v182
        %268 = vmatpush1.msra.mxu0 %v181
        %269 = vmatprep.subr.mxu0 %v184
        %270 = vmatpush1.msra.mxu0 %v183
        %271 = vmatprep.subr.mxu0 %v186
        %272 = vmatpush1.msra.mxu0 %v185
        %273 = vmatprep.subr.mxu0 %v188
        %274 = vmatpush1.msra.mxu0 %v187
        %275 = vmatprep.subr.mxu0 %v190
        %276 = vmatpush1.msra.mxu0 %v189
        %277 = vmatprep.subr.mxu0 %v192
        %278 = vmatpush1.msra.mxu0 %v191
        %279 = vmatprep.subr.mxu0 %v194
        %280 = vmatpush1.msra.mxu0 %v193
        %281 = vmatprep.subr.mxu0 %v196
        %282 = vmatpush1.msra.mxu0 %v195
        %283 = vmatprep.subr.mxu0 %v198
        %284 = vmatpush1.msra.mxu0 %v197
        %285 = vmatprep.subr.mxu0 %v200
        %286 = vmatpush1.msra.mxu0 %v199
        %287 = vmatprep.subr.mxu0 %v202
        %288 = vmatpush1.msra.mxu0 %v201
        %289 = vmatprep.subr.mxu0 %v204
        %290 = vmatpush1.msra.mxu0 %v203
        %291 = vmatprep.subr.mxu0 %v206
        %292 = vmatpush1.msra.mxu0 %v205
        %293 = vmatprep.subr.mxu0 %v208
        %294 = vmatpush1.msra.mxu0 %v207
        %295 = vmatprep.subr.mxu0 %v210
        %296 = vmatpush1.msra.mxu0 %v209
        %297 = vmatprep.subr.mxu0 %v212
        %298 = vmatpush1.msra.mxu0 %v211
        %299 = vmatprep.subr.mxu0 %v261
        %300 = vmatpush1.msra.mxu0 %v258
        %301 = vmatprep.subr.mxu0 0.0
        %302 = vmatpush1.msra.mxu0 0.0
        %303 = vmatprep.subr.mxu0 0.0
        %304 = vmatpush1.msra.mxu0 0.0
        %305 = vmatprep.subr.mxu0 0.0
        %306 = vmatpush1.msra.mxu0 0.0
        %307 = vmatprep.subr.mxu0 0.0
        %308 = vmatpush1.msra.mxu0 0.0
        %309 = vmatprep.subr.mxu0 0.0
        %310 = vmatpush1.msra.mxu0 0.0
        %311 = vmatprep.subr.mxu0 0.0
        %312 = vmatpush1.msra.mxu0 0.0
        %313 = vmatprep.subr.mxu0 0.0
        %314 = vmatpush1.msra.mxu0 0.0
        %315 = vmatprep.subr.mxu0 0.0
        %316 = vmatpush1.msra.mxu0 0.0
        %317 = vmatprep.subr.mxu0 0.0
        %318 = vmatpush1.msra.mxu0 0.0
        %319 = vmatprep.subr.mxu0 0.0
        %320 = vmatpush1.msra.mxu0 0.0
        %321 = vmatprep.subr.mxu0 0.0
        %322 = vmatpush1.msra.mxu0 0.0
        %323 = vmatprep.subr.mxu0 0.0
        %324 = vmatpush1.msra.mxu0 0.0
        %325 = vmatprep.subr.mxu0 0.0
        %326 = vmatpush1.msra.mxu0 0.0
        %327 = vmatprep.mubr.f32.mxu0 %v233
        %328 = vmatmul.mubr.f32.gmra.mrb[0].mxu0 %v215
        %v329 = vpop.f32.mrb[0].mxu0
        %v330 = vadd.f32 0.0, %v329
        %v331 = vpop.f32.mrb[0].mxu0
        %v332 = vadd.f32 0.0, %v331
        %333 = vmatprep.mubr.f32.mxu0 %v236
        %334 = vmatmul.mubr.f32.gmra.mrb[0].mxu0 %v217
        %v335 = vpop.f32.mrb[0].mxu0
        %v336 = vadd.f32 0.0, %v335
        %v337 = vpop.f32.mrb[0].mxu0
        %v338 = vadd.f32 0.0, %v337
        %339 = vmatprep.mubr.f32.mxu0 %v239
        %340 = vmatmul.mubr.f32.gmra.mrb[0].mxu0 %v219
        %v341 = vpop.f32.mrb[0].mxu0
        %v342 = vadd.f32 0.0, %v341
        %v343 = vpop.f32.mrb[0].mxu0
        %v344 = vadd.f32 0.0, %v343
        %345 = vmatprep.mubr.f32.mxu0 %v242
        %346 = vmatmul.mubr.f32.gmra.mrb[0].mxu0 %v221
        %v347 = vpop.f32.mrb[0].mxu0
        %v348 = vadd.f32 0.0, %v347
        %v349 = vpop.f32.mrb[0].mxu0
        %v350 = vadd.f32 0.0, %v349
        %351 = vmatprep.mubr.f32.mxu0 %v245
        %352 = vmatmul.mubr.f32.gmra.mrb[0].mxu0 %v223
        %v353 = vpop.f32.mrb[0].mxu0
        %v354 = vadd.f32 0.0, %v353
        %v355 = vpop.f32.mrb[0].mxu0
        %v356 = vadd.f32 0.0, %v355
        %357 = vmatprep.mubr.f32.mxu0 %v248
        %358 = vmatmul.mubr.f32.gmra.mrb[0].mxu0 %v225
        %v359 = vpop.f32.mrb[0].mxu0
        %v360 = vadd.f32 0.0, %v359
        %v361 = vpop.f32.mrb[0].mxu0
        %v362 = vadd.f32 0.0, %v361
        %363 = vmatprep.mubr.f32.mxu0 %v251
        %364 = vmatmul.mubr.f32.gmra.mrb[0].mxu0 %v227
        %v365 = vpop.f32.mrb[0].mxu0
        %v366 = vadd.f32 0.0, %v365
        %v367 = vpop.f32.mrb[0].mxu0
        %v368 = vadd.f32 0.0, %v367
        %369 = vmatprep.mubr.f32.mxu0 %v254
        %370 = vmatmul.mubr.f32.gmra.mrb[0].mxu0 %v229
        %v371 = vpop.f32.mrb[0].mxu0
        %v372 = vadd.f32 0.0, %v371
        %v373 = vpop.f32.mrb[0].mxu0
        %v374 = vadd.f32 0.0, %v373
        %375 = vdwg.mxu0
        %v376 = vadd.f32 %v330, %v332
        %377 = vadd.xlane.f32.xlu0 %v376
        %v378 = vpop.xlane.xlu0 %377
        %v379 = vadd.f32 %v336, %v338
        %380 = vadd.xlane.f32.xlu0 %v379
        %v381 = vpop.xlane.xlu0 %380
        %v382 = vadd.f32 %v342, %v344
        %383 = vadd.xlane.f32.xlu0 %v382
        %v384 = vpop.xlane.xlu0 %383
        %v385 = vadd.f32 %v348, %v350
        %386 = vadd.xlane.f32.xlu0 %v385
        %v387 = vpop.xlane.xlu0 %386
        %v388 = vadd.f32 %v354, %v356
        %389 = vadd.xlane.f32.xlu0 %v388
        %v390 = vpop.xlane.xlu0 %389
        %v391 = vadd.f32 %v360, %v362
        %392 = vadd.xlane.f32.xlu0 %v391
        %v393 = vpop.xlane.xlu0 %392
        %v394 = vadd.f32 %v366, %v368
        %395 = vadd.xlane.f32.xlu0 %v394
        %v396 = vpop.xlane.xlu0 %395
        %v397 = vadd.f32 %v372, %v374
        %398 = vadd.xlane.f32.xlu0 %v397
        %v399 = vpop.xlane.xlu0 %398
        %v400 = vrcp.pop 256.0
        %v401 = vmul.f32 %v378, %v400
        %v402 = vmul.f32 %v381, %v400
        %v403 = vmul.f32 %v384, %v400
        %v404 = vmul.f32 %v387, %v400
        %v405 = vmul.f32 %v390, %v400
        %v406 = vmul.f32 %v393, %v400
        %v407 = vmul.f32 %v396, %v400
        %v408 = vmul.f32 %v399, %v400
        %v409 = vsub.f32 %v330, %v401
        %v410 = vsub.f32 %v332, %v401
        %v411 = vsub.f32 %v336, %v402
        %v412 = vsub.f32 %v338, %v402
        %v413 = vsub.f32 %v342, %v403
        %v414 = vsub.f32 %v344, %v403
        %v415 = vsub.f32 %v348, %v404
        %v416 = vsub.f32 %v350, %v404
        %v417 = vsub.f32 %v354, %v405
        %v418 = vsub.f32 %v356, %v405
        %v419 = vsub.f32 %v360, %v406
        %v420 = vsub.f32 %v362, %v406
        %v421 = vsub.f32 %v366, %v407
        %v422 = vsub.f32 %v368, %v407
        %v423 = vsub.f32 %v372, %v408
        %v424 = vsub.f32 %v374, %v408
        %v425 = vmul.f32 %v409, %v409
        %v426 = vmul.f32 %v410, %v410
        %v427 = vmul.f32 %v411, %v411
        %v428 = vmul.f32 %v412, %v412
        %v429 = vmul.f32 %v413, %v413
        %v430 = vmul.f32 %v414, %v414
        %v431 = vmul.f32 %v415, %v415
        %v432 = vmul.f32 %v416, %v416
        %v433 = vmul.f32 %v417, %v417
        %v434 = vmul.f32 %v418, %v418
        %v435 = vmul.f32 %v419, %v419
        %v436 = vmul.f32 %v420, %v420
        %v437 = vmul.f32 %v421, %v421
        %v438 = vmul.f32 %v422, %v422
        %v439 = vmul.f32 %v423, %v423
        %v440 = vmul.f32 %v424, %v424
        %v441 = vadd.f32 %v425, %v426
        %442 = vadd.xlane.f32.xlu0 %v441
        %v443 = vpop.xlane.xlu0 %442
        %v444 = vadd.f32 %v427, %v428
        %445 = vadd.xlane.f32.xlu0 %v444
        %v446 = vpop.xlane.xlu0 %445
        %v447 = vadd.f32 %v429, %v430
        %448 = vadd.xlane.f32.xlu0 %v447
        %v449 = vpop.xlane.xlu0 %448
        %v450 = vadd.f32 %v431, %v432
        %451 = vadd.xlane.f32.xlu0 %v450
        %v452 = vpop.xlane.xlu0 %451
        %v453 = vadd.f32 %v433, %v434
        %454 = vadd.xlane.f32.xlu0 %v453
        %v455 = vpop.xlane.xlu0 %454
        %v456 = vadd.f32 %v435, %v436
        %457 = vadd.xlane.f32.xlu0 %v456
        %v458 = vpop.xlane.xlu0 %457
        %v459 = vadd.f32 %v437, %v438
        %460 = vadd.xlane.f32.xlu0 %v459
        %v461 = vpop.xlane.xlu0 %460
        %v462 = vadd.f32 %v439, %v440
        %463 = vadd.xlane.f32.xlu0 %v462
        %v464 = vpop.xlane.xlu0 %463
        %v465 = vmul.f32 %v443, %v400
        %v466 = vmul.f32 %v446, %v400
        %v467 = vmul.f32 %v449, %v400
        %v468 = vmul.f32 %v452, %v400
        %v469 = vmul.f32 %v455, %v400
        %v470 = vmul.f32 %v458, %v400
        %v471 = vmul.f32 %v461, %v400
        %v472 = vmul.f32 %v464, %v400
        %v473 = vadd.f32 %v465, 1e-05
        %v474 = vadd.f32 %v466, 1e-05
        %v475 = vadd.f32 %v467, 1e-05
        %v476 = vadd.f32 %v468, 1e-05
        %v477 = vadd.f32 %v469, 1e-05
        %v478 = vadd.f32 %v470, 1e-05
        %v479 = vadd.f32 %v471, 1e-05
        %v480 = vadd.f32 %v472, 1e-05
        %v481 = vrsqrt.pop %v473
        %v482 = vrsqrt.pop %v474
        %v483 = vrsqrt.pop %v475
        %v484 = vrsqrt.pop %v476
        %v485 = vrsqrt.pop %v477
        %v486 = vrsqrt.pop %v478
        %v487 = vrsqrt.pop %v479
        %v488 = vrsqrt.pop %v480
        %v489 = vmul.f32 %v409, %v481
        %v490 = vmul.f32 %v410, %v481
        %v491 = vmul.f32 %v411, %v482
        %v492 = vmul.f32 %v412, %v482
        %v493 = vmul.f32 %v413, %v483
        %v494 = vmul.f32 %v414, %v483
        %v495 = vmul.f32 %v415, %v484
        %v496 = vmul.f32 %v416, %v484
        %v497 = vmul.f32 %v417, %v485
        %v498 = vmul.f32 %v418, %v485
        %v499 = vmul.f32 %v419, %v486
        %v500 = vmul.f32 %v420, %v486
        %v501 = vmul.f32 %v421, %v487
        %v502 = vmul.f32 %v422, %v487
        %v503 = vmul.f32 %v423, %v488
        %v504 = vmul.f32 %v424, %v488
        %v505 = vmax.f32 %v489, 0.0
        %v506 = vmax.f32 %v490, 0.0
        %v507 = vmax.f32 %v491, 0.0
        %v508 = vmax.f32 %v492, 0.0
        %v509 = vmax.f32 %v493, 0.0
        %v510 = vmax.f32 %v494, 0.0
        %v511 = vmax.f32 %v495, 0.0
        %v512 = vmax.f32 %v496, 0.0
        %v513 = vmax.f32 %v497, 0.0
        %v514 = vmax.f32 %v498, 0.0
        %v515 = vmax.f32 %v499, 0.0
        %v516 = vmax.f32 %v500, 0.0
        %v517 = vmax.f32 %v501, 0.0
        %v518 = vmax.f32 %v502, 0.0
        %v519 = vmax.f32 %v503, 0.0
        %v520 = vmax.f32 %v504, 0.0
        %521 = vst [vmem:[%s176] sm:$0xff] %v505
        %522 = vst [vmem:[%s176 + $0x8] sm:$0xff] %v506
        %523 = vst [vmem:[%s176 + $0x10] sm:$0xff] %v507
        %524 = vst [vmem:[%s176 + $0x18] sm:$0xff] %v508
        %525 = vst [vmem:[%s176 + $0x20] sm:$0xff] %v509
        %526 = vst [vmem:[%s176 + $0x28] sm:$0xff] %v510
        %527 = vst [vmem:[%s176 + $0x30] sm:$0xff] %v511
        %528 = vst [vmem:[%s176 + $0x38] sm:$0xff] %v512
        %529 = vst [vmem:[%s176 + $0x40] sm:$0xff] %v513
        %530 = vst [vmem:[%s176 + $0x48] sm:$0xff] %v514
        %531 = vst [vmem:[%s176 + $0x50] sm:$0xff] %v515
        %532 = vst [vmem:[%s176 + $0x58] sm:$0xff] %v516
        %533 = vst [vmem:[%s176 + $0x60] sm:$0xff] %v517
        %534 = vst [vmem:[%s176 + $0x68] sm:$0xff] %v518
        %535 = vst [vmem:[%s176 + $0x70] sm:$0xff] %v519
        %536 = vst [vmem:[%s176 + $0x78] sm:$0xff] %v520
        %s537 = sand.u32 %s75, 1
        %s538 = scalar_lea.sflag [#allocation4], %s537
        %s539 = sand.u32 %s75, 1
        %s540 = smul.addr %s539, 128
        %s541 = scalar_lea.vmem [#allocation7], %s540
        // Predicated region
        $region37: #{tpu_custom_call.1} parent=27 // pred_check
          %p542 = pneg %p85
        $region38: #{tpu_custom_call.1} parent=27 // pred_check_branch
          %544 = sbr.rel (%p542) target = $region40
        $region39: #{tpu_custom_call.1} parent=27 // pred_region
          %s546 = ssub.s32 2048, 2048
          %547 = vsyncadd %s538, %s546
          %s548 = smul.addr %s20, 16
          %s549 = smul.addr %s548, 128
          %s550 = scalar_lea.hbm %s2, %s549
          %s551 = sshll.u32 %s541, 4
          %s552 = int_to_ptr.vmem [resolvable:$true] %s551
          %557 = dma.vmem_to_hbm [thread:$0]  %s552, 2048, %s550, %s538, 256, 256, 16
        $region40: #{tpu_custom_call.1} parent=27 // pred_fallthru
          _
      $region28: #{tpu_custom_call.1} parent=5 // pred_fallthru
        _
      %p558 = scmp.le.s32.totalorder 2, %s15
      // Predicated region
      $region41: #{tpu_custom_call.1} parent=5 // pred_check
        %p559 = pneg %p558
      $region42: #{tpu_custom_call.1} parent=5 // pred_check_branch
        %561 = sbr.rel (%p559) target = $region44
      $region43: #{tpu_custom_call.1} parent=5 // pred_region
        %s562 = ssub.s32 %s15, 2
        // Predicated region
        $region45: #{tpu_custom_call.1} parent=43 // pred_check
          %p563 = pneg %p91
        $region46: #{tpu_custom_call.1} parent=43 // pred_check_branch
          %565 = sbr.rel (%p563) target = $region48
        $region47: #{tpu_custom_call.1} parent=43 // pred_region
          %s566 = sand.u32 %s76, 1
          %s567 = scalar_lea.sflag [#allocation4], %s566
          %s568 = sand.u32 %s76, 1
          %s569 = smul.addr %s568, 128
          %s570 = scalar_lea.vmem [#allocation7], %s569
          %571 = dma.done %s567, 2048
        $region48: #{tpu_custom_call.1} parent=43 // pred_fallthru
          _
      $region44: #{tpu_custom_call.1} parent=5 // pred_fallthru
        _
    $region6: #{tpu_custom_call.1} parent=1 // loop_footer
      %s19 = sadd.s32 1, %s15
    $region7: #{tpu_custom_call.1} parent=1 // loop_footer_branch
      %14 = sbr.rel target = $region3
    $region8: #{tpu_custom_call.1} parent=1 // loop_exit
      _
    %572 = vsyncpa [#allocation3], 1
    %s573 = scalar_lea.sflag [#allocation3], 1
    %574 = vsyncpa %s573, 1
    %575 = vsyncpa [#allocation6], 1
    %576 = vsyncpa [#allocation4], 1
    %s577 = scalar_lea.sflag [#allocation4], 1
    %578 = vsyncpa %s577, 1

</llo_original>
